<compile_context>
chip_gen: v6e
topology: v6e:2x2x1
jax: 0.10.0
libtpu: 0.0.40
codegen_flags: <defaults>
</compile_context>

<pallas_src>
import functools

import jax
import jax.numpy as jnp
from jax.experimental import pallas as pl
from jax.experimental.pallas import tpu as pltpu


def _label_smoothing_kernel(x_ref, tgt_ref, out_ref, *, smoothing, n_valid, tile_rows):
    i = pl.program_id(0)

    x = x_ref[...].astype(jnp.float32)          # (TN, C) logits (cast in-kernel)
    tgt = tgt_ref[...]                          # (TN, 1) int32 class indices
    tn, c = x.shape

    # Mask rows that are padding (N was rounded up to a multiple of TN).
    row_ids = i * tile_rows + jax.lax.broadcasted_iota(jnp.int32, (tn, 1), 0)
    valid = (row_ids < n_valid).astype(jnp.float32)             # (TN, 1)

    # Rowwise logsumexp (numerically stable), no (TN, C) logprobs temporary.
    m = jnp.max(x, axis=-1, keepdims=True)                      # (TN, 1)
    lse = m + jnp.log(jnp.sum(jnp.exp(x - m), axis=-1, keepdims=True))  # (TN, 1)

    # x[target] via a masked lane-select + sum (no dynamic gather on TPU).
    col = jax.lax.broadcasted_iota(jnp.int32, (tn, c), 1)       # (TN, C) lane ids
    x_at_tgt = jnp.sum(jnp.where(col == tgt, x, 0.0), axis=-1, keepdims=True)
    x_mean = jnp.mean(x, axis=-1, keepdims=True)                # (TN, 1)

    nll_loss = lse - x_at_tgt        # -logprobs[target]
    smooth_loss = lse - x_mean       # -mean(logprobs)
    loss = (1.0 - smoothing) * nll_loss + smoothing * smooth_loss   # (TN, 1)

    part = jnp.sum(loss * valid)                                # scalar partial sum
    # Lane-dense (1, 128) output block per tile; wrapper reads lane 0.
    out_ref[...] = jnp.full((1, 128), part, dtype=jnp.float32)


def _choose_tile_rows(n, c, itemsize, vmem_budget_bytes=20 * 1024 * 1024):
    # Double-buffered: 2 x (x tile + target tile padded to 128 lanes of i32).
    per_row = c * itemsize + 128 * 4
    tn = vmem_budget_bytes // (2 * per_row)
    n_pad8 = ((n + 7) // 8) * 8
    tn = max(8, min(int(tn), 2048, n_pad8))
    return (tn // 8) * 8


def label_smoothing_loss(x, target, smoothing=0.1):
    """x: (N, C) float logits (f32/bf16); target: (N,) int labels. Returns scalar f32."""
    n, c = x.shape
    itemsize = jnp.dtype(x.dtype).itemsize
    tn = _choose_tile_rows(n, c, itemsize)

    n_pad = ((n + tn - 1) // tn) * tn
    num_tiles = n_pad // tn
    if n_pad != n:
        x = jnp.pad(x, ((0, n_pad - n), (0, 0)))
        target = jnp.pad(target, (0, n_pad - n))
    tgt2d = target.astype(jnp.int32).reshape(n_pad, 1)

    kernel = functools.partial(
        _label_smoothing_kernel,
        smoothing=float(smoothing),
        n_valid=n,
        tile_rows=tn,
    )

    out = pl.pallas_call(
        kernel,
        out_shape=jax.ShapeDtypeStruct((1, num_tiles * 128), jnp.float32),
        grid=(num_tiles,),
        in_specs=[
            pl.BlockSpec((tn, c), lambda i: (i, 0)),   # logits row tile
            pl.BlockSpec((tn, 1), lambda i: (i, 0)),   # targets row tile
        ],
        out_specs=pl.BlockSpec((1, 128), lambda i: (0, i)),
        compiler_params=pltpu.CompilerParams(
            dimension_semantics=("parallel",),
            vmem_limit_bytes=32 * 1024 * 1024,
        ),
        cost_estimate=pl.CostEstimate(
            flops=5 * n_pad * c,
            transcendentals=n_pad * c,
            bytes_accessed=n_pad * c * itemsize + n_pad * 4 + num_tiles * 128 * 4,
        ),
    )(x, tgt2d)

    partials = out.reshape(num_tiles, 128)[:, 0]
    return jnp.sum(partials) / jnp.float32(n)


def _reference(x, target, smoothing=0.1):
    logprobs = jax.nn.log_softmax(x.astype(jnp.float32), axis=-1)
    nll = -jnp.take_along_axis(logprobs, target[:, None], axis=-1)[:, 0]
    smooth = -jnp.mean(logprobs, axis=-1)
    loss = (1.0 - smoothing) * nll + smoothing * smooth
    return jnp.mean(loss)


if __name__ == "__main__":
    # Case 1: small shape matching the module's usage (N rows of C-class logits).
    key = jax.random.PRNGKey(0)
    kx, kt = jax.random.split(key)
    N, C = 8, 32
    x = jax.random.normal(kx, (N, C), dtype=jnp.float32)
    target = jax.random.randint(kt, (N,), 0, C, dtype=jnp.int32)

    loss = jax.block_until_ready(label_smoothing_loss(x, target, smoothing=0.1))
    ref = _reference(x, target, smoothing=0.1)
    assert jnp.allclose(loss, ref, atol=1e-5, rtol=1e-5), (loss, ref)

    # Case 2: N not a multiple of the row tile -> exercises pad + in-kernel mask.
    kx2, kt2 = jax.random.split(jax.random.PRNGKey(0))
    N2, C2 = 13, 160
    x2 = jax.random.normal(kx2, (N2, C2), dtype=jnp.float32)
    t2 = jax.random.randint(kt2, (N2,), 0, C2, dtype=jnp.int32)

    loss2 = jax.block_until_ready(label_smoothing_loss(x2, t2, smoothing=0.1))
    ref2 = _reference(x2, t2, smoothing=0.1)
    assert jnp.allclose(loss2, ref2, atol=1e-5, rtol=1e-5), (loss2, ref2)

    print("KERNEL_OK")
</pallas_src>

<mosaic_0001>
module attributes {stable_mosaic.version = 11 : i64} {
  func.func @_label_smoothing_kernel(%arg0: i32, %arg1: memref<8x32xf32, #tpu.memory_space<vmem>>, %arg2: memref<8x1xi32, #tpu.memory_space<vmem>>, %arg3: memref<1x128xf32, #tpu.memory_space<vmem>>) attributes {dimension_semantics = [#tpu.dimension_semantics<parallel>], iteration_bounds = array<i64: 1>, scalar_prefetch = 0 : i64, scratch_operands = 0 : i64, tpu.core_type = #tpu.core_type<tc>, window_params = [{transform_indices = @transform_0, window_bounds = array<i64: 8, 32>}, {transform_indices = @transform_1, window_bounds = array<i64: 8, 1>}, {transform_indices = @transform_2, window_bounds = array<i64: 1, 128>}]} {
    %c0 = arith.constant 0 : index
    %c0_0 = arith.constant 0 : index
    %0 = vector.load %arg1[%c0, %c0_0] : memref<8x32xf32, #tpu.memory_space<vmem>>, vector<8x32xf32>
    %c0_1 = arith.constant 0 : index
    %c0_2 = arith.constant 0 : index
    %1 = vector.load %arg2[%c0_1, %c0_2] : memref<8x1xi32, #tpu.memory_space<vmem>>, vector<8x1xi32>
    %c8_i32 = arith.constant 8 : i32
    %2 = arith.muli %arg0, %c8_i32 : i32
    %3 = tpu.iota {dimensions = array<i32: 0>} : vector<8x1xi32>
    %4 = vector.broadcast %2 : i32 to vector<8x1xi32>
    %5 = arith.addi %4, %3 : vector<8x1xi32>
    %c8_i32_3 = arith.constant 8 : i32
    %6 = vector.broadcast %c8_i32_3 : i32 to vector<8x1xi32>
    %7 = arith.cmpi slt, %5, %6 : vector<8x1xi32>
    %8 = arith.extui %7 : vector<8x1xi1> to vector<8x1xi32>
    %9 = arith.sitofp %8 : vector<8x1xi32> to vector<8x1xf32>
    %cst = arith.constant dense<0xFF800000> : vector<8xf32>
    %10 = vector.multi_reduction <maximumf>, %0, %cst [1] : vector<8x32xf32> to vector<8xf32>
    %11 = vector.shape_cast %10 : vector<8xf32> to vector<8x1xf32>
    %12 = vector.broadcast %11 : vector<8x1xf32> to vector<8x32xf32>
    %13 = arith.subf %0, %12 : vector<8x32xf32>
    %14 = math.exp %13 : vector<8x32xf32>
    %cst_4 = arith.constant dense<0.000000e+00> : vector<8xf32>
    %15 = vector.multi_reduction <add>, %14, %cst_4 [1] : vector<8x32xf32> to vector<8xf32>
    %16 = vector.shape_cast %15 : vector<8xf32> to vector<8x1xf32>
    %17 = math.log %16 : vector<8x1xf32>
    %18 = arith.addf %11, %17 : vector<8x1xf32>
    %19 = tpu.iota {dimensions = array<i32: 1>} : vector<8x32xi32>
    %20 = vector.broadcast %1 : vector<8x1xi32> to vector<8x32xi32>
    %21 = arith.cmpi eq, %19, %20 : vector<8x32xi32>
    %cst_5 = arith.constant 0.000000e+00 : f32
    %22 = vector.broadcast %cst_5 : f32 to vector<8x32xf32>
    %23 = arith.select %21, %0, %22 : vector<8x32xi1>, vector<8x32xf32>
    %cst_6 = arith.constant dense<0.000000e+00> : vector<8xf32>
    %24 = vector.multi_reduction <add>, %23, %cst_6 [1] : vector<8x32xf32> to vector<8xf32>
    %25 = vector.shape_cast %24 : vector<8xf32> to vector<8x1xf32>
    %cst_7 = arith.constant dense<0.000000e+00> : vector<8xf32>
    %26 = vector.multi_reduction <add>, %0, %cst_7 [1] : vector<8x32xf32> to vector<8xf32>
    %27 = vector.shape_cast %26 : vector<8xf32> to vector<8x1xf32>
    %cst_8 = arith.constant 3.200000e+01 : f32
    %28 = vector.broadcast %cst_8 : f32 to vector<8x1xf32>
    %29 = arith.divf %27, %28 : vector<8x1xf32>
    %30 = arith.subf %18, %25 : vector<8x1xf32>
    %31 = arith.subf %18, %29 : vector<8x1xf32>
    %cst_9 = arith.constant 0.899999976 : f32
    %32 = vector.broadcast %cst_9 : f32 to vector<8x1xf32>
    %33 = arith.mulf %32, %30 : vector<8x1xf32>
    %cst_10 = arith.constant 1.000000e-01 : f32
    %34 = vector.broadcast %cst_10 : f32 to vector<8x1xf32>
    %35 = arith.mulf %34, %31 : vector<8x1xf32>
    %36 = arith.addf %33, %35 : vector<8x1xf32>
    %37 = arith.mulf %36, %9 : vector<8x1xf32>
    %38 = vector.shape_cast %37 : vector<8x1xf32> to vector<1x8x1xf32>
    %cst_11 = arith.constant dense<0.000000e+00> : vector<1xf32>
    %39 = vector.multi_reduction <add>, %38, %cst_11 [1, 2] : vector<1x8x1xf32> to vector<1xf32>
    %40 = vector.shape_cast %39 : vector<1xf32> to vector<1x1x1xf32>
    %41 = vector.extract %40[0, 0, 0] : f32 from vector<1x1x1xf32>
    %42 = vector.broadcast %41 : f32 to vector<1x128xf32>
    %c0_12 = arith.constant 0 : index
    %c0_13 = arith.constant 0 : index
    %43 = vector.load %arg3[%c0_12, %c0_13] : memref<1x128xf32, #tpu.memory_space<vmem>>, vector<1x128xf32>
    tpu.vector_store %arg3[%c0_12, %c0_13], %42 {strides = array<i32>} : memref<1x128xf32, #tpu.memory_space<vmem>>, vector<1x128xf32>,
    return
  }
  func.func @transform_0(%arg0: i32) -> (i32, i32) {
    %c0_i32 = arith.constant 0 : i32
    %c0_i32_0 = arith.constant 0 : i32
    return %arg0, %c0_i32 : i32, i32
  }
  func.func @transform_1(%arg0: i32) -> (i32, i32) {
    %c0_i32 = arith.constant 0 : i32
    %c0_i32_0 = arith.constant 0 : i32
    return %arg0, %c0_i32 : i32, i32
  }
  func.func @transform_2(%arg0: i32) -> (i32, i32) {
    %c0_i32 = arith.constant 0 : i32
    %c0_i32_0 = arith.constant 0 : i32
    return %c0_i32, %arg0 : i32, i32
  }
}

</mosaic_0001>

<llo_original>
// kernel: tpu_custom_call.1
$region0: #{tpu_custom_call.1}
  #allocation0 [shape = 'u32[]', space=smem, size = 0x4, offset = 0x4, fixed_abs, tag = 'smem constant byte address 0x4 - core index']
  #allocation1 [shape = 'u32[144,128]{1,0:T(1,128)}', space=vmem, size = 0x12000, scoped, tag = 'internal scratch']
  %s0 = inlined_call_operand.vmem [shape: f32[8,32], index: 0, kind: input, shape index: {}]
  %s1 = inlined_call_operand.vmem [shape: s32[8,1], index: 1, kind: input, shape index: {}]
  %s2 = inlined_call_operand.hbm [shape: f32[1,128], index: 2, kind: output, shape index: {}]
  %s3 = sld [smem:[#allocation0]]
  $region18: #{tpu_custom_call.1} parent=0
    _
  %s5 = ssub.s32 1, %s3
  %s6 = scalar_select 0, %s5, %s3
  $region1: #{tpu_custom_call.1} parent=0
    #allocation2 [shape = 'u8[512]{0}', space=vmem, size = 0x400, scoped, tag = 'output window, operand 0, single buffered']
    #allocation3 [shape = 's32[1]{0}', space=sflag, size = 0x4, scoped, tag = 'scoped memory for tpu_custom_call.1']
    %7 = vsyncpa [#allocation3], 0
    // Predicated region
    $region2: #{tpu_custom_call.1} parent=1 // pred_check
      _
    $region3: #{tpu_custom_call.1} parent=1 // pred_check_branch
      %9 = sbr.rel (0) target = $region5
    $region4: #{tpu_custom_call.1} parent=1 // pred_region
      _
    $region5: #{tpu_custom_call.1} parent=1 // pred_fallthru
      _
    // Predicated region
    $region6: #{tpu_custom_call.1} parent=1 // pred_check
      _
    $region7: #{tpu_custom_call.1} parent=1 // pred_check_branch
      %11 = sbr.rel (0) target = $region9
    $region8: #{tpu_custom_call.1} parent=1 // pred_region
      _
    $region9: #{tpu_custom_call.1} parent=1 // pred_fallthru
      _
    %v12 = vld [vmem:[%s0] sm:$0xff]
    %v13 = vld [vmem:[%s1] sm:$0xff]
    %s14 = smul.u32 0, 8
    %v15 = vlaneseq
    %v16 = vshrl.u32 %v15, 7
    %v17 = vstv %s14
    %v18 = vadd.s32 %v17, %v16
    %vm19 = vcmp.lt.s32.totalorder %v18, 8
    %v20 = vsel %vm19, 1, 0
    %v21 = vcvt.s32.f32 %v20
    %vm22 = vcmask 261120
    %v23 = vsel %vm22, %v12, -inf
    %24 = vmax.xlane.f32.xlu0 %v23
    %v25 = vpop.xlane.xlu0 %24
    %v26 = vsub.f32 %v12, %v25
    %v27 = vmul.f32 %v26, 1.442695
    %v28 = vpow.pop %v27
    %v29 = vsel %vm22, %v28, 0.0
    %30 = vadd.xlane.f32.xlu0 %v29
    %v31 = vpop.xlane.xlu0 %30
    %v32 = vlog2.pop %v31
    %v33 = vmul.f32 %v32, 0.6931472
    %v34 = vadd.f32 %v25, %v33
    %v35 = vlaneseq
    %v36 = vand.u32 %v35, 127
    %37 = vset.pattern.permute.xlu0 0
    %38 = vperm.xlu0 %37, %v13
    %v39 = vpop.permute.xlu0 %38
    %vm40 = vcmp.eq.s32.totalorder %v36, %v39
    %v41 = vsel %vm40, %v12, 0.0
    %v42 = vsel %vm22, %v41, 0.0
    %43 = vadd.xlane.f32.xlu0 %v42
    %v44 = vpop.xlane.xlu0 %43
    %v45 = vsel %vm22, %v12, 0.0
    %46 = vadd.xlane.f32.xlu0 %v45
    %v47 = vpop.xlane.xlu0 %46
    %v48 = vrcp.pop 32.0
    %v49 = vmul.f32 %v47, %v48
    %v50 = vsub.f32 %v34, %v44
    %v51 = vsub.f32 %v34, %v49
    %v52 = vmul.f32 %v50, 0.9
    %v53 = vmul.f32 %v51, 0.1
    %v54 = vadd.f32 %v52, %v53
    %v55 = vmul.f32 %v54, %v21
    %vm56 = vcmask 7168
    %v57 = vsel %vm56, %v55, 0.0
    %58 = vadd.xlane.f32.xlu0 %v57
    %v59 = vpop.xlane.xlu0 %58
    %v60 = vrot.slane %v59, 4
    %v61 = vadd.f32 %v59, %v60
    %v62 = vrot.slane %v61, 2
    %v63 = vadd.f32 %v61, %v62
    %v64 = vrot.slane %v63, 1
    %v65 = vadd.f32 %v63, %v64
    %s66 = vtos %v65
    %v67 = vstv %s66
    %68 = vst [vmem:[#allocation2] sm:$0x1] %v67
    // Predicated region
    $region10: #{tpu_custom_call.1} parent=1 // pred_check
      _
    $region11: #{tpu_custom_call.1} parent=1 // pred_check_branch
      %70 = sbr.rel (0) target = $region13
    $region12: #{tpu_custom_call.1} parent=1 // pred_region
      %s72 = ssub.s32 16, 16
      %73 = vsyncadd [#allocation3], %s72
      %s75 = sshll.u32 [#allocation2], 4
      %s76 = int_to_ptr.vmem [resolvable:$true] %s75
      %78 = dma.vmem_to_hbm [thread:$0]  %s76, 16, %s2, [#allocation3]
    $region13: #{tpu_custom_call.1} parent=1 // pred_fallthru
      _
    // Predicated region
    $region14: #{tpu_custom_call.1} parent=1 // pred_check
      _
    $region15: #{tpu_custom_call.1} parent=1 // pred_check_branch
      %80 = sbr.rel (0) target = $region17
    $region16: #{tpu_custom_call.1} parent=1 // pred_region
      %81 = dma.done [#allocation3], 16
    $region17: #{tpu_custom_call.1} parent=1 // pred_fallthru
      _
    %82 = vsyncpa [#allocation3], 1

</llo_original>
